<compile_context>
chip_gen: v7x
topology: tpu7x:2x2x1
jax: 0.10.0
libtpu: 0.0.40
codegen_flags: <defaults>
</compile_context>

<pallas_src>
import jax
import jax.numpy as jnp
from jax.experimental import pallas as pl
from jax.experimental.pallas import tpu as pltpu


def _round_up(x, m):
    return ((x + m - 1) // m) * m


def _pick_tile(dim, candidates):
    """Largest candidate that exactly divides dim (dim is a multiple of the smallest)."""
    for c in candidates:
        if dim % c == 0:
            return c
    return dim


# ---------------------------------------------------------------------------
# Kernels
# ---------------------------------------------------------------------------

def _fc_kernel_2d(x_ref, w_ref, b_ref, o_ref):
    """Whole contraction dim in one tile.
    x_ref: (tm, Dp)  w_ref: (Dp, tn)  b_ref: (1, tn)  o_ref: (tm, tn)"""
    o_ref[...] = (
        jnp.dot(x_ref[...], w_ref[...], preferred_element_type=jnp.float32)
        + b_ref[...]
    ).astype(o_ref.dtype)


def _fc_kernel_3d(x_ref, w_ref, b_ref, o_ref):
    """k-innermost reduction; accumulate directly into the f32 output block
    (its index_map ignores k, so it stays resident in VMEM across k steps).
    x_ref: (tm, tk)  w_ref: (tk, tn)  b_ref: (1, tn)  o_ref: (tm, tn) f32"""
    k = pl.program_id(2)
    partial = jnp.dot(x_ref[...], w_ref[...], preferred_element_type=jnp.float32)

    @pl.when(k == 0)
    def _():
        # Direct write of the first partial product + bias: no zero-init store,
        # no extra full-tile load.
        o_ref[...] = partial + b_ref[...]

    @pl.when(k != 0)
    def _():
        o_ref[...] += partial


# ---------------------------------------------------------------------------
# Parameter preparation (one-time, hoisted out of the forward path)
# ---------------------------------------------------------------------------

def prepare_fc_params(weight, bias):
    """Pad the PyTorch-layout (C, D) weight to hardware minimums and store it
    transposed as (Dp, Cp); pad bias to (1, Cp). Done once at init so the
    per-call path never re-pads / re-transposes the (bandwidth-dominant) weight."""
    C, D = weight.shape
    Cp = _round_up(C, 128)
    Dp = _round_up(D, 128)
    w_dc = jnp.asarray(jnp.pad(weight, ((0, Cp - C), (0, Dp - D))).T)   # (Dp, Cp)
    b_row = jnp.pad(bias, (0, Cp - C)).reshape(1, Cp)                    # (1, Cp)
    return w_dc, b_row


# ---------------------------------------------------------------------------
# Forward
# ---------------------------------------------------------------------------

_TK_MAX = 512  # collapse the k axis when the whole contraction fits one tile


def feat_classifier_forward(x, w_dc, b_row, class_num):
    """x: (B, D) f32; w_dc: (Dp, Cp) f32 pre-padded/transposed; b_row: (1, Cp) f32.
    Returns (B, class_num) f32 == x @ W^T + b."""
    B, D = x.shape
    Dp, Cp = w_dc.shape
    assert x.dtype == jnp.float32  # f32-only path (exact PyTorch parity)

    Bp = _round_up(B, 8)
    # Only the (small) activation is padded per call; zeros along D are safe
    # because the weight's padded D rows are zero as well.
    if Bp != B or Dp != D:
        x = jnp.pad(x, ((0, Bp - B), (0, Dp - D)))

    # Tiles are divisors of the minimally-padded sizes -> no padding waste.
    tm = _pick_tile(Bp, (256, 128, 64, 32, 16, 8))
    tn = _pick_tile(Cp, (512, 256, 128))

    # v7x: make sure both TensorCores get at least one parallel tile each.
    if (Bp // tm) * (Cp // tn) < 2:
        if tm >= 16:
            tm //= 2
        elif tn >= 256:
            tn //= 2

    cost = pl.CostEstimate(
        flops=2 * Bp * Cp * Dp,
        bytes_accessed=(Bp * Dp + Dp * Cp + Bp * Cp) * 4,
        transcendentals=0,
    )
    out_shape = jax.ShapeDtypeStruct((Bp, Cp), jnp.float32)

    if Dp <= _TK_MAX:
        # Common case (bottleneck_dim <= 512): no reduction axis, no scratch.
        out = pl.pallas_call(
            _fc_kernel_2d,
            out_shape=out_shape,
            grid=(Bp // tm, Cp // tn),
            in_specs=[
                pl.BlockSpec((tm, Dp), lambda i, j: (i, 0)),   # x    (Bp, Dp)
                pl.BlockSpec((Dp, tn), lambda i, j: (0, j)),   # W^T  (Dp, Cp)
                pl.BlockSpec((1, tn), lambda i, j: (0, j)),    # bias (1, Cp)
            ],
            out_specs=pl.BlockSpec((tm, tn), lambda i, j: (i, j)),
            compiler_params=pltpu.CompilerParams(
                dimension_semantics=("parallel", "parallel"),
            ),
            cost_estimate=cost,
        )(x, w_dc, b_row)
    else:
        tk = _pick_tile(Dp, (512, 256, 128))
        out = pl.pallas_call(
            _fc_kernel_3d,
            out_shape=out_shape,
            grid=(Bp // tm, Cp // tn, Dp // tk),
            in_specs=[
                pl.BlockSpec((tm, tk), lambda i, j, k: (i, k)),   # x
                pl.BlockSpec((tk, tn), lambda i, j, k: (k, j)),   # W^T
                pl.BlockSpec((1, tn), lambda i, j, k: (0, j)),    # bias
            ],
            out_specs=pl.BlockSpec((tm, tn), lambda i, j, k: (i, j)),
            compiler_params=pltpu.CompilerParams(
                dimension_semantics=("parallel", "parallel", "arbitrary"),
            ),
            cost_estimate=cost,
        )(x, w_dc, b_row)

    if Bp == B and Cp == class_num:
        return out
    return out[:B, :class_num]


def init_params(key, class_num, bottleneck_dim):
    """Synthetic init mirroring init_weights for nn.Linear:
    xavier_normal_ on weight, zeros on bias (PyTorch (C, D) layout)."""
    std = (2.0 / (class_num + bottleneck_dim)) ** 0.5
    w = std * jax.random.normal(key, (class_num, bottleneck_dim), dtype=jnp.float32)
    b = jnp.zeros((class_num,), dtype=jnp.float32)
    return w, b


if __name__ == "__main__":
    key = jax.random.PRNGKey(0)
    k_x, k_w, k_x2, k_w2 = jax.random.split(key, 4)

    # --- primary small test (2D / no-k path) ---
    batch, bottleneck_dim, class_num = 8, 32, 16
    x = jax.random.normal(k_x, (batch, bottleneck_dim), dtype=jnp.float32)
    weight, bias = init_params(k_w, class_num, bottleneck_dim)
    w_dc, b_row = prepare_fc_params(weight, bias)          # one-time param prep

    out = feat_classifier_forward(x, w_dc, b_row, class_num)
    out = jax.block_until_ready(out)
    ref = x @ weight.T + bias
    assert out.shape == (batch, class_num)
    assert jnp.allclose(out, ref, atol=1e-5, rtol=1e-5)

    # --- secondary test exercising the k-reduction (3D) path ---
    batch2, bottleneck_dim2, class_num2 = 16, 640, 40
    x2 = jax.random.normal(k_x2, (batch2, bottleneck_dim2), dtype=jnp.float32)
    weight2, bias2 = init_params(k_w2, class_num2, bottleneck_dim2)
    w_dc2, b_row2 = prepare_fc_params(weight2, bias2)

    out2 = feat_classifier_forward(x2, w_dc2, b_row2, class_num2)
    out2 = jax.block_until_ready(out2)
    ref2 = x2 @ weight2.T + bias2
    assert out2.shape == (batch2, class_num2)
    assert jnp.allclose(out2, ref2, atol=1e-4, rtol=1e-5)

    print("KERNEL_OK")
</pallas_src>

<mosaic_0001>
module attributes {stable_mosaic.version = 11 : i64} {
  func.func @_fc_kernel_2d(%arg0: i32, %arg1: i32, %arg2: memref<8x128xf32, #tpu.memory_space<vmem>>, %arg3: memref<128x128xf32, #tpu.memory_space<vmem>>, %arg4: memref<1x128xf32, #tpu.memory_space<vmem>>, %arg5: memref<8x128xf32, #tpu.memory_space<vmem>>) attributes {dimension_semantics = [#tpu.dimension_semantics<parallel>, #tpu.dimension_semantics<parallel>], iteration_bounds = array<i64: 1, 1>, scalar_prefetch = 0 : i64, scratch_operands = 0 : i64, tpu.core_type = #tpu.core_type<tc>, window_params = [{transform_indices = @transform_0, window_bounds = array<i64: 8, 128>}, {transform_indices = @transform_1, window_bounds = array<i64: 128, 128>}, {transform_indices = @transform_2, window_bounds = array<i64: 1, 128>}, {transform_indices = @transform_3, window_bounds = array<i64: 8, 128>}]} {
    %c0 = arith.constant 0 : index
    %c0_0 = arith.constant 0 : index
    %0 = vector.load %arg2[%c0, %c0_0] : memref<8x128xf32, #tpu.memory_space<vmem>>, vector<8x128xf32>
    %c0_1 = arith.constant 0 : index
    %c0_2 = arith.constant 0 : index
    %1 = vector.load %arg3[%c0_1, %c0_2] : memref<128x128xf32, #tpu.memory_space<vmem>>, vector<128x128xf32>
    %cst = arith.constant dense<0.000000e+00> : vector<8x128xf32>
    %2 = tpu.matmul %0, %1, %cst {dimension_numbers = #tpu.dot_dimension_numbers<[1], [0], [0], [1], [0, 0, 1, 1], [], []>} : vector<8x128xf32>, vector<128x128xf32>, vector<8x128xf32> -> vector<8x128xf32>
    %c0_3 = arith.constant 0 : index
    %c0_4 = arith.constant 0 : index
    %3 = vector.load %arg4[%c0_3, %c0_4] : memref<1x128xf32, #tpu.memory_space<vmem>>, vector<1x128xf32>
    %4 = vector.broadcast %3 : vector<1x128xf32> to vector<8x128xf32>
    %5 = arith.addf %2, %4 : vector<8x128xf32>
    %c0_5 = arith.constant 0 : index
    %c0_6 = arith.constant 0 : index
    %6 = vector.load %arg5[%c0_5, %c0_6] : memref<8x128xf32, #tpu.memory_space<vmem>>, vector<8x128xf32>
    tpu.vector_store %arg5[%c0_5, %c0_6], %5 {strides = array<i32>} : memref<8x128xf32, #tpu.memory_space<vmem>>, vector<8x128xf32>,
    return
  }
  func.func @transform_0(%arg0: i32, %arg1: i32) -> (i32, i32) {
    %c0_i32 = arith.constant 0 : i32
    %c0_i32_0 = arith.constant 0 : i32
    return %arg0, %c0_i32 : i32, i32
  }
  func.func @transform_1(%arg0: i32, %arg1: i32) -> (i32, i32) {
    %c0_i32 = arith.constant 0 : i32
    %c0_i32_0 = arith.constant 0 : i32
    return %c0_i32, %arg1 : i32, i32
  }
  func.func @transform_2(%arg0: i32, %arg1: i32) -> (i32, i32) {
    %c0_i32 = arith.constant 0 : i32
    %c0_i32_0 = arith.constant 0 : i32
    return %c0_i32, %arg1 : i32, i32
  }
  func.func @transform_3(%arg0: i32, %arg1: i32) -> (i32, i32) {
    %c0_i32 = arith.constant 0 : i32
    return %arg0, %arg1 : i32, i32
  }
}

</mosaic_0001>

<llo_original>
// kernel: tpu_custom_call.1
$region0: #{tpu_custom_call.1}
  #allocation0 [shape = 'u32[]', space=smem, size = 0x4, offset = 0x4, fixed_abs, tag = 'smem constant byte address 0x4 - core index']
  #allocation1 [shape = 'u32[144,128]{1,0:T(1,128)}', space=vmem, size = 0x12000, scoped, tag = 'internal scratch']
  %s0 = inlined_call_operand.hbm [shape: f32[8,128], index: 0, kind: input, shape index: {}]
  %s1 = inlined_call_operand.hbm [shape: f32[128,128], index: 1, kind: input, shape index: {}]
  %s2 = inlined_call_operand.vmem [shape: f32[1,128], index: 2, kind: input, shape index: {}]
  %s3 = inlined_call_operand.hbm [shape: f32[8,128], index: 3, kind: output, shape index: {}]
  %s4 = sld [smem:[#allocation0]]
  $region30: #{tpu_custom_call.1} parent=0
    _
  %s6 = ssub.s32 1, %s4
  %s7 = scalar_select 0, %s6, %s4
  $region1: #{tpu_custom_call.1} parent=0
    #allocation2 [shape = 'u8[4096]{0}', space=vmem, size = 0x1000, scoped, tag = 'input window, operand 0, single buffered']
    #allocation3 [shape = 's32[1]{0}', space=sflag, size = 0x4, scoped, tag = 'scoped memory for tpu_custom_call.1']
    #allocation4 [shape = 's32[1]{0}', space=sflag, size = 0x4, scoped, tag = 'scoped memory for tpu_custom_call.1']
    #allocation5 [shape = 'u8[65536]{0}', space=vmem, size = 0x10000, scoped, tag = 'input window, operand 1, single buffered']
    #allocation6 [shape = 's32[1]{0}', space=sflag, size = 0x4, scoped, tag = 'scoped memory for tpu_custom_call.1']
    #allocation7 [shape = 'u8[4096]{0}', space=vmem, size = 0x1000, scoped, tag = 'output window, operand 0, single buffered']
    %8 = vsyncpa [#allocation3], 0
    %9 = vsyncpa [#allocation6], 0
    %10 = vsyncpa [#allocation4], 0
    // Predicated region
    $region2: #{tpu_custom_call.1} parent=1 // pred_check
      _
    $region3: #{tpu_custom_call.1} parent=1 // pred_check_branch
      %12 = sbr.rel (0) target = $region5
    $region4: #{tpu_custom_call.1} parent=1 // pred_region
      %s14 = ssub.s32 128, 128
      %15 = vsyncadd [#allocation3], %s14
      %s17 = sshll.u32 [#allocation2], 4
      %s18 = int_to_ptr.vmem [resolvable:$true] %s17
      %20 = dma.hbm_to_vmem [thread:$0]  %s0, 128, %s18, [#allocation3]
    $region5: #{tpu_custom_call.1} parent=1 // pred_fallthru
      _
    // Predicated region
    $region6: #{tpu_custom_call.1} parent=1 // pred_check
      _
    $region7: #{tpu_custom_call.1} parent=1 // pred_check_branch
      %22 = sbr.rel (0) target = $region9
    $region8: #{tpu_custom_call.1} parent=1 // pred_region
      %s24 = ssub.s32 2048, 2048
      %25 = vsyncadd [#allocation6], %s24
      %s26 = sshll.u32 [#allocation5], 4
      %s27 = int_to_ptr.vmem [resolvable:$true] %s26
      %32 = dma.hbm_to_vmem [thread:$0]  %s1, 2048, %s27, [#allocation6], 128, 128, 8
    $region9: #{tpu_custom_call.1} parent=1 // pred_fallthru
      _
    // Predicated region
    $region10: #{tpu_custom_call.1} parent=1 // pred_check
      _
    $region11: #{tpu_custom_call.1} parent=1 // pred_check_branch
      %34 = sbr.rel (0) target = $region13
    $region12: #{tpu_custom_call.1} parent=1 // pred_region
      _
    $region13: #{tpu_custom_call.1} parent=1 // pred_fallthru
      _
    // Predicated region
    $region14: #{tpu_custom_call.1} parent=1 // pred_check
      _
    $region15: #{tpu_custom_call.1} parent=1 // pred_check_branch
      %36 = sbr.rel (0) target = $region17
    $region16: #{tpu_custom_call.1} parent=1 // pred_region
      %37 = dma.done [#allocation3], 128
    $region17: #{tpu_custom_call.1} parent=1 // pred_fallthru
      _
    // Predicated region
    $region18: #{tpu_custom_call.1} parent=1 // pred_check
      _
    $region19: #{tpu_custom_call.1} parent=1 // pred_check_branch
      %39 = sbr.rel (0) target = $region21
    $region20: #{tpu_custom_call.1} parent=1 // pred_region
      %40 = dma.done [#allocation6], 2048
    $region21: #{tpu_custom_call.1} parent=1 // pred_fallthru
      _
    %v41 = vld [vmem:[#allocation2] sm:$0xff]
    %v42 = vld [vmem:[#allocation5] sm:$0xff]
    %v43 = vld [vmem:[#allocation5 + $0x8] sm:$0xff]
    %v44 = vld [vmem:[#allocation5 + $0x10] sm:$0xff]
    %v45 = vld [vmem:[#allocation5 + $0x18] sm:$0xff]
    %v46 = vld [vmem:[#allocation5 + $0x20] sm:$0xff]
    %v47 = vld [vmem:[#allocation5 + $0x28] sm:$0xff]
    %v48 = vld [vmem:[#allocation5 + $0x30] sm:$0xff]
    %v49 = vld [vmem:[#allocation5 + $0x38] sm:$0xff]
    %v50 = vld [vmem:[#allocation5 + $0x40] sm:$0xff]
    %v51 = vld [vmem:[#allocation5 + $0x48] sm:$0xff]
    %v52 = vld [vmem:[#allocation5 + $0x50] sm:$0xff]
    %v53 = vld [vmem:[#allocation5 + $0x58] sm:$0xff]
    %v54 = vld [vmem:[#allocation5 + $0x60] sm:$0xff]
    %v55 = vld [vmem:[#allocation5 + $0x68] sm:$0xff]
    %v56 = vld [vmem:[#allocation5 + $0x70] sm:$0xff]
    %v57 = vld [vmem:[#allocation5 + $0x78] sm:$0xff]
    %v58 = vld [vmem:[%s2] sm:$0x1]
    %v60 = vlaneseq
    %v61 = vshrl.u32 %v60, 7
    %v62 = vsub.s32 0, %v61
    %v63 = vrot.slane %v58, %v62
    %65 = vmatprep.subr.mxu0 0.0
    %66 = vmatpush1.msra.mxu0 %v42
    %67 = vmatprep.subr.mxu0 0.0
    %68 = vmatpush1.msra.mxu0 %v43
    %69 = vmatprep.subr.mxu0 0.0
    %70 = vmatpush1.msra.mxu0 %v44
    %71 = vmatprep.subr.mxu0 0.0
    %72 = vmatpush1.msra.mxu0 %v45
    %73 = vmatprep.subr.mxu0 0.0
    %74 = vmatpush1.msra.mxu0 %v46
    %75 = vmatprep.subr.mxu0 0.0
    %76 = vmatpush1.msra.mxu0 %v47
    %77 = vmatprep.subr.mxu0 0.0
    %78 = vmatpush1.msra.mxu0 %v48
    %79 = vmatprep.subr.mxu0 0.0
    %80 = vmatpush1.msra.mxu0 %v49
    %81 = vmatprep.subr.mxu0 0.0
    %82 = vmatpush1.msra.mxu0 %v50
    %83 = vmatprep.subr.mxu0 0.0
    %84 = vmatpush1.msra.mxu0 %v51
    %85 = vmatprep.subr.mxu0 0.0
    %86 = vmatpush1.msra.mxu0 %v52
    %87 = vmatprep.subr.mxu0 0.0
    %88 = vmatpush1.msra.mxu0 %v53
    %89 = vmatprep.subr.mxu0 0.0
    %90 = vmatpush1.msra.mxu0 %v54
    %91 = vmatprep.subr.mxu0 0.0
    %92 = vmatpush1.msra.mxu0 %v55
    %93 = vmatprep.subr.mxu0 0.0
    %94 = vmatpush1.msra.mxu0 %v56
    %95 = vmatprep.subr.mxu0 0.0
    %96 = vmatpush1.msra.mxu0 %v57
    %97 = vmatprep.subr.mxu0 0.0
    %98 = vmatpush1.msra.mxu0 0.0
    %99 = vmatprep.subr.mxu0 0.0
    %100 = vmatpush1.msra.mxu0 0.0
    %101 = vmatprep.subr.mxu0 0.0
    %102 = vmatpush1.msra.mxu0 0.0
    %103 = vmatprep.subr.mxu0 0.0
    %104 = vmatpush1.msra.mxu0 0.0
    %105 = vmatprep.subr.mxu0 0.0
    %106 = vmatpush1.msra.mxu0 0.0
    %107 = vmatprep.subr.mxu0 0.0
    %108 = vmatpush1.msra.mxu0 0.0
    %109 = vmatprep.subr.mxu0 0.0
    %110 = vmatpush1.msra.mxu0 0.0
    %111 = vmatprep.subr.mxu0 0.0
    %112 = vmatpush1.msra.mxu0 0.0
    %113 = vmatprep.subr.mxu0 0.0
    %114 = vmatpush1.msra.mxu0 0.0
    %115 = vmatprep.subr.mxu0 0.0
    %116 = vmatpush1.msra.mxu0 0.0
    %117 = vmatprep.subr.mxu0 0.0
    %118 = vmatpush1.msra.mxu0 0.0
    %119 = vmatprep.subr.mxu0 0.0
    %120 = vmatpush1.msra.mxu0 0.0
    %121 = vmatprep.subr.mxu0 0.0
    %122 = vmatpush1.msra.mxu0 0.0
    %123 = vmatprep.subr.mxu0 0.0
    %124 = vmatpush1.msra.mxu0 0.0
    %125 = vmatprep.subr.mxu0 0.0
    %126 = vmatpush1.msra.mxu0 0.0
    %127 = vmatprep.subr.mxu0 0.0
    %128 = vmatpush1.msra.mxu0 0.0
    %129 = vmatprep.mubr.f32.mxu0 0.0
    %130 = vmatmul.mubr.f32.gmra.mrb[0].mxu0 %v41
    %v131 = vpop.f32.mrb[0].mxu0
    %v132 = vadd.f32 %v63, %v131
    %v133 = vpop.f32.mrb[0].mxu0
    %134 = vdwg.mxu0
    %135 = vst [vmem:[#allocation7] sm:$0xff] %v132
    // Predicated region
    $region22: #{tpu_custom_call.1} parent=1 // pred_check
      _
    $region23: #{tpu_custom_call.1} parent=1 // pred_check_branch
      %137 = sbr.rel (0) target = $region25
    $region24: #{tpu_custom_call.1} parent=1 // pred_region
      %s139 = ssub.s32 128, 128
      %140 = vsyncadd [#allocation4], %s139
      %s142 = sshll.u32 [#allocation7], 4
      %s143 = int_to_ptr.vmem [resolvable:$true] %s142
      %145 = dma.vmem_to_hbm [thread:$0]  %s143, 128, %s3, [#allocation4]
    $region25: #{tpu_custom_call.1} parent=1 // pred_fallthru
      _
    // Predicated region
    $region26: #{tpu_custom_call.1} parent=1 // pred_check
      _
    $region27: #{tpu_custom_call.1} parent=1 // pred_check_branch
      %147 = sbr.rel (0) target = $region29
    $region28: #{tpu_custom_call.1} parent=1 // pred_region
      %148 = dma.done [#allocation4], 128
    $region29: #{tpu_custom_call.1} parent=1 // pred_fallthru
      _
    %149 = vsyncpa [#allocation3], 1
    %150 = vsyncpa [#allocation6], 1
    %151 = vsyncpa [#allocation4], 1

</llo_original>
